<compile_context>
chip_gen: v5e
topology: v5e:2x2
jax: 0.10.0
libtpu: 0.0.40
codegen_flags: <defaults>
</compile_context>

<pallas_src>
import jax
import jax.numpy as jnp
from jax.experimental import pallas as pl
from jax.experimental.pallas import tpu as pltpu


def local_module_forward(x):
    """Faithful port of LocalModule.forward: the body is `pass`, returns None.

    Production path per the perf review: no kernel launch, no HBM traffic,
    zero overhead on v5e / v6e / v7x.
    """
    del x
    return None


def _make_noop_kernel(tile_rows, tile_cols):
    def _noop_kernel(x_hbm_ref, o_hbm_ref, vbuf, sem):
        # Zero-cost plumbing: read one tiny tile (~4 KiB) so the kernel has a
        # real data dependency on the input.  The output ref is never written;
        # its contents come entirely from input/output aliasing, so no
        # full-tensor HBM read or write is issued by this kernel.
        del o_hbm_ref
        cp = pltpu.make_async_copy(
            x_hbm_ref.at[:tile_rows, :tile_cols], vbuf, sem
        )
        cp.start()
        cp.wait()

    return _noop_kernel


def pallas_noop_passthrough(x):
    """Test-only Pallas path: returns x's values via a zero-DMA no-op kernel."""
    n, c, h, w = x.shape
    # Flatten to 2-D only to take a simple static tile slice.  The eager
    # reshape also gives the donated/aliased operand its own buffer, so the
    # caller's `x` stays valid after the call.
    x2d = x.reshape(n * c, h * w)
    rows, cols = x2d.shape
    tile_rows = min(rows, 8)
    tile_cols = min(cols, 128)

    out2d = pl.pallas_call(
        _make_noop_kernel(tile_rows, tile_cols),
        out_shape=jax.ShapeDtypeStruct((rows, cols), x2d.dtype),
        # ANY memory space: data stays where it is; no auto-DMA, no tiling.
        in_specs=[pl.BlockSpec(memory_space=pl.ANY)],
        out_specs=pl.BlockSpec(memory_space=pl.ANY),
        scratch_shapes=[
            pltpu.VMEM((tile_rows, tile_cols), x2d.dtype),
            pltpu.SemaphoreType.DMA,
        ],
        # Output aliases input: contents are preserved with zero copy.
        input_output_aliases={0: 0},
        compiler_params=pltpu.CompilerParams(has_side_effects=True),
    )(x2d)

    return out2d.reshape(n, c, h, w)


if __name__ == "__main__":
    key = jax.random.PRNGKey(0)
    # NCHW image-stream-style input at a small deterministic shape.
    x = jax.random.normal(key, (2, 4, 16, 16), dtype=jnp.float32)

    # Production path: faithful no-op forward (returns None, launches nothing).
    result = local_module_forward(x)
    assert result is None

    # Plumbing path: zero-DMA Pallas kernel whose output aliases the input.
    passthrough = pallas_noop_passthrough(x)
    jax.block_until_ready(passthrough)

    assert passthrough.shape == x.shape
    assert passthrough.dtype == x.dtype
    assert jnp.array_equal(passthrough, x)

    print("KERNEL_OK")
</pallas_src>

<mosaic_0001>
module attributes {stable_mosaic.version = 11 : i64} {
  func.func @_noop_kernel(%arg0: memref<8x256xf32, #tpu.memory_space<any>>, %arg1: memref<8x256xf32, #tpu.memory_space<any>>, %arg2: memref<8x128xf32, #tpu.memory_space<vmem>>, %arg3: memref<!tpu.dma_semaphore, #tpu.memory_space<semaphore_mem>>) attributes {dimension_semantics = [], scalar_prefetch = 0 : i64, scratch_operands = 2 : i64, tpu.core_type = #tpu.core_type<tc>} {
    %c0_i32 = arith.constant 0 : i32
    %c0_i32_0 = arith.constant 0 : i32
    %0 = tpu.memref_slice %arg0[%c0_i32, %c0_i32_0] : memref<8x256xf32, #tpu.memory_space<any>> -> memref<8x128xf32, #tpu.memory_space<any>>
    tpu.enqueue_dma source(%0 : memref<8x128xf32, #tpu.memory_space<any>>) target(%arg2 : memref<8x128xf32, #tpu.memory_space<vmem>>) target_semaphore(%arg3 : memref<!tpu.dma_semaphore, #tpu.memory_space<semaphore_mem>>)
    %c0_i32_1 = arith.constant 0 : i32
    %c0_i32_2 = arith.constant 0 : i32
    %1 = tpu.memref_slice %arg0[%c0_i32_1, %c0_i32_2] : memref<8x256xf32, #tpu.memory_space<any>> -> memref<8x128xf32, #tpu.memory_space<any>>
    tpu.wait_dma2 semaphore(%arg3 : memref<!tpu.dma_semaphore, #tpu.memory_space<semaphore_mem>>) src(%1 : memref<8x128xf32, #tpu.memory_space<any>>) dst(%arg2 : memref<8x128xf32, #tpu.memory_space<vmem>>)
    return
  }
}

</mosaic_0001>

<llo_original>
// kernel: tpu_custom_call.1
$region0: #{tpu_custom_call.1}
  #allocation0 [shape = 'u32[]', space=smem, size = 0x4, offset = 0x4, fixed_abs, tag = 'smem constant byte address 0x4 - core index']
  #allocation1 [shape = 'u32[72,128]{1,0:T(1,128)}', space=vmem, size = 0x9000, scoped, tag = 'internal scratch']
  #allocation2 [shape = 'f32[8,128]{1,0:T(8,128)}', space=vmem, size = 0x1000, scoped, tag = 'scratch operand']
  #allocation3 [shape = 's32[1]{0}', space=sflag, size = 0x4, scoped, tag = 'scratch operand']
  #allocation4 [shape = 's32[]', space=sflag, size = 0x4, offset = 0, fixed_abs, tag = 'sflag constant byte address 0x0 - dummy sync flag']
  #allocation5 [shape = 's32[]', space=sflag, size = 0x4, offset = 0, fixed_abs, tag = 'sflag constant byte address 0x0 - dummy sync flag']
  #allocation6 [shape = 'u32[]', space=smem, size = 0x4, offset = 0x44, fixed_abs, tag = 'smem constant byte address 0x44 - assertion arg 0']
  #allocation7 [shape = 'u32[]', space=smem, size = 0x4, offset = 0x48, fixed_abs, tag = 'smem constant byte address 0x48 - assertion arg 1']
  %s0 = inlined_call_operand.hbm [shape: f32[8,256], index: 0, kind: input, shape index: {}, may-alias: {0,1}]
  %s1 = inlined_call_operand.hbm [shape: f32[8,256], index: 1, kind: output, shape index: {}, may-alias: {0,1}]
  %s2 = sld [smem:[#allocation0]]
  $region6: #{tpu_custom_call.1} parent=0
    _
  %s4 = ssub.s32 1, %s2
  %s5 = scalar_select 0, %s4, %s2
  // Predicated region
  $region2: #{tpu_custom_call.1} parent=0 // pred_check
    _
  $region3: #{tpu_custom_call.1} parent=0 // pred_check_branch
    %7 = sbr.rel target = $region5
  $region4: #{tpu_custom_call.1} parent=0 // pred_region
    %8 = sst [smem:[#allocation6]] [#allocation5]
    %9 = sst [smem:[#allocation7]] [#allocation4]
  $region5: #{tpu_custom_call.1} parent=0 // pred_fallthru
    _
  %11 = shalt.err (0)
  %s13 = sshll.u32 %s0, 4
  %s14 = int_to_ptr.hbm [resolvable:$true] %s13
  %s15 = sshll.u32 [#allocation2], 4
  %s16 = int_to_ptr.vmem [resolvable:$true] %s15
  %18 = dma.hbm_to_vmem [thread:$0]  %s14, 128, %s16, [#allocation3]
  %s19 = smul.u32 8, 1
  %s20 = smul.u32 %s19, 1
  %s21 = sshll.u32 %s20, 4
  %22 = dma.done [#allocation3], %s21
  %23 = vsyncmov [#allocation3]
  %s24 = vpop.sfrf %23
  %p25 = scmp.eq.s32.totalorder %s24, 0
  %p26 = pneg %p25
  %28 = shalt.err (%p26)

</llo_original>
